<compile_context>
chip_gen: v6e
topology: v6e:2x2x1
jax: 0.10.0
libtpu: 0.0.40
codegen_flags: <defaults>
</compile_context>

<pallas_src>
import functools

import jax
import jax.numpy as jnp
from jax.experimental import pallas as pl
from jax.experimental.pallas import tpu as pltpu


def _round_up(x: int, m: int) -> int:
    return ((x + m - 1) // m) * m


# --------------------------------------------------------------------------- #
# Fused kernel
# --------------------------------------------------------------------------- #
def _make_mlp_kernel(num_layers: int, compute_dtype):
    """h = x; for each W: h = relu(h @ W); store h (ReLU after EVERY layer)."""

    def kernel(x_ref, *refs):
        w_refs = refs[:num_layers]
        o_ref = refs[num_layers]
        h = x_ref[...]                                    # [tm, Fin_p]
        for idx, w_ref in enumerate(w_refs):
            acc = jnp.dot(h, w_ref[...],                  # MXU matmul
                          preferred_element_type=jnp.float32)
            act = jnp.maximum(acc, 0.0)                   # ReLU on f32 accumulator
            # Narrow only if another layer follows; last layer stores from f32.
            h = act.astype(compute_dtype) if idx + 1 < num_layers else act
        o_ref[...] = h.astype(o_ref.dtype)

    return kernel


# --------------------------------------------------------------------------- #
# Generation-aware resource helpers
# --------------------------------------------------------------------------- #
def _vmem_capacity_bytes() -> int:
    """Physical VMEM per TensorCore (64 MiB on v7x, 128 MiB on v5e/v6e)."""
    try:
        info = pltpu.get_tpu_info()
        cap = getattr(info, "vmem_capacity_bytes", None)
        if cap:
            return int(cap)
    except Exception:
        pass
    try:
        kind = jax.devices()[0].device_kind.lower()
        if "v7" in kind:
            return 64 * 1024 * 1024
    except Exception:
        pass
    return 128 * 1024 * 1024


def _vmem_estimate_bytes(tm, fin_p, widths_p, c_item, o_item):
    # Weights are single-buffered (pl.Buffered(1)) -> exactly one resident copy.
    w_bytes, prev = 0, fin_p
    for w in widths_p:
        w_bytes += prev * w * c_item
        prev = w
    x_tile = 2 * tm * fin_p * c_item            # double-buffered input tile
    o_tile = 2 * tm * widths_p[-1] * o_item     # double-buffered output tile
    act = 2 * tm * max([fin_p] + widths_p) * 4  # f32 intermediates (+slack)
    return w_bytes + x_tile + o_tile + act


def _pick_batch_tile(B, sublane, max_width_p, vmem_budget, batch_tile):
    if batch_tile is not None:
        tm = max(sublane, (batch_tile // sublane) * sublane)
    else:
        # Big tiles amortize the ~0.35 us/grid-step overhead (128->512 moved a
        # mem-bound kernel from ~29% to ~85% of HBM roofline on v6e); keep v7x
        # (smaller VMEM budget) at 256.
        base = 512 if vmem_budget >= 80 * 1024 * 1024 else 256
        # Spill guard: keep the f32 accumulator tile <= ~128 KiB (half the
        # 64-vreg file) so MXU results / ReLU stay in registers -- v5e has a
        # single vector-store slot and spill stores serialize behind the output.
        cap = ((128 * 1024) // (max_width_p * 4) // sublane) * sublane
        tm = min(base, max(sublane, cap))
    tm = min(tm, _round_up(B, sublane))
    tm = max(sublane, tm)
    # Prefer >= 2 batch tiles whenever possible so dimension_semantics
    # ("parallel",) can shard the grid across v7x's two TensorCores.
    while tm > sublane and pl.cdiv(_round_up(B, sublane), tm) < 2:
        tm = max(sublane, _round_up(tm // 2, sublane))
    return tm


# --------------------------------------------------------------------------- #
# Parameter prep (hoisted out of the per-call forward)
# --------------------------------------------------------------------------- #
def prepare_mlp_params(params, *, compute_dtype=jnp.bfloat16):
    """Zero-pad each weight's feature dims to multiples of 128 ONCE.

    Padding is exact: padded rows/cols contribute 0 to the dots and relu(0)=0.
    Returns (padded_weights_tuple, in_features, out_features).
    """
    assert len(params) >= 1
    in_features = params[0].shape[0]
    prev_f, prev_p = in_features, _round_up(in_features, 128)
    padded = []
    for w in params:
        fi, fo = w.shape
        assert fi == prev_f, "layer shape mismatch"
        fo_p = _round_up(fo, 128)
        wp = jnp.zeros((prev_p, fo_p), dtype=compute_dtype)
        wp = wp.at[:fi, :fo].set(w.astype(compute_dtype))
        padded.append(wp)
        prev_f, prev_p = fo, fo_p
    return tuple(padded), in_features, prev_f


# --------------------------------------------------------------------------- #
# Forward
# --------------------------------------------------------------------------- #
def mlp_forward_padded(x, padded_ws, *, in_features, out_features,
                       compute_dtype=jnp.bfloat16, out_dtype=None,
                       batch_tile=None):
    """Fused MLP forward on pre-padded weights: y = relu(...relu(x @ W0)... @ WL)."""
    B, Fin = x.shape
    assert Fin == in_features
    num_layers = len(padded_ws)
    out_dtype = x.dtype if out_dtype is None else out_dtype

    fin_p = padded_ws[0].shape[0]
    widths_p = [wp.shape[1] for wp in padded_ws]
    fout_p = widths_p[-1]
    assert fin_p == _round_up(Fin, 128)
    assert fout_p == _round_up(out_features, 128)

    c_item = jnp.dtype(compute_dtype).itemsize
    o_item = jnp.dtype(out_dtype).itemsize
    sublane = 16 if c_item == 2 else 8          # bf16 vreg is [16,128]

    capacity = _vmem_capacity_bytes()
    vmem_budget = int(capacity * 3 // 4)        # ~48 MiB v7x, ~96 MiB v5e/v6e

    tm = _pick_batch_tile(B, sublane, max([fin_p] + widths_p), vmem_budget,
                          batch_tile)
    b_p = _round_up(B, tm)

    vmem_needed = _vmem_estimate_bytes(tm, fin_p, widths_p, c_item, o_item)
    # TODO(synk): stream weight N-tiles with an inner pltpu.emit_pipeline when
    # the total weight footprint exceeds the VMEM budget instead of failing.
    assert vmem_needed <= vmem_budget - 2 * 1024 * 1024, (
        f"fused-MLP VMEM footprint {vmem_needed / 2**20:.1f} MiB exceeds "
        f"budget {vmem_budget / 2**20:.1f} MiB; weight streaming not implemented")

    # Pad only the activation tile per call (weights were padded once, outside).
    x_p = jnp.zeros((b_p, fin_p), dtype=compute_dtype)
    x_p = x_p.at[:B, :Fin].set(x.astype(compute_dtype))

    grid = (b_p // tm,)
    in_specs = [pl.BlockSpec((tm, fin_p), lambda i: (i, 0))]
    for wp in padded_ws:
        fi_p, fo_p = wp.shape
        # Constant block index -> weight DMA'd once and resident for the whole
        # call; Buffered(1) keeps a single VMEM copy (no useless double buffer).
        in_specs.append(pl.BlockSpec((fi_p, fo_p), lambda i: (0, 0),
                                     pipeline_mode=pl.Buffered(1)))
    out_specs = pl.BlockSpec((tm, fout_p), lambda i: (i, 0))

    flops = 2 * b_p * sum(wp.shape[0] * wp.shape[1] for wp in padded_ws)
    bytes_accessed = (x_p.size * c_item
                      + sum(wp.size * c_item for wp in padded_ws)
                      + b_p * fout_p * o_item)

    out_padded = pl.pallas_call(
        _make_mlp_kernel(num_layers, compute_dtype),
        out_shape=jax.ShapeDtypeStruct((b_p, fout_p), out_dtype),
        grid_spec=pl.GridSpec(grid=grid, in_specs=in_specs, out_specs=out_specs),
        compiler_params=pltpu.CompilerParams(
            dimension_semantics=("parallel",),   # batch tiles shard across TCs
            vmem_limit_bytes=int(vmem_budget),
        ),
        cost_estimate=pl.CostEstimate(
            flops=flops, transcendentals=0, bytes_accessed=bytes_accessed),
    )(x_p, *padded_ws)

    return out_padded[:B, :out_features]


def mlp_forward(x, params, *, compute_dtype=jnp.bfloat16, out_dtype=None,
                batch_tile=None):
    """Convenience one-shot path (pads weights per call; prefer prepare + jit)."""
    padded_ws, fin, fout = prepare_mlp_params(params, compute_dtype=compute_dtype)
    return mlp_forward_padded(x, padded_ws, in_features=fin, out_features=fout,
                              compute_dtype=compute_dtype, out_dtype=out_dtype,
                              batch_tile=batch_tile)


# --------------------------------------------------------------------------- #
# Reference + synthetic init
# --------------------------------------------------------------------------- #
def init_mlp_params(key, in_features, hidden_layer_sizes, dtype=jnp.float32):
    """Synthetic weights like nn.Linear(in, out, bias=False), stored as
    [in_features, out_features] (y = x @ W)."""
    params, fan_in = [], in_features
    for fan_out in hidden_layer_sizes:
        key, sub = jax.random.split(key)
        bound = 1.0 / jnp.sqrt(jnp.array(fan_in, dtype=jnp.float32))
        w = jax.random.uniform(sub, (fan_in, fan_out), dtype=dtype,
                               minval=-bound, maxval=bound)
        params.append(w)
        fan_in = fan_out
    return params


def mlp_reference(x, params):
    out = x
    for w in params:
        out = jnp.maximum(out @ w, 0.0)
    return out


if __name__ == "__main__":
    key = jax.random.PRNGKey(0)
    batch = 8
    in_features = 16
    hidden_layer_sizes = [32, 64, 16]

    kx, kp = jax.random.split(key)
    x = jax.random.normal(kx, (batch, in_features), dtype=jnp.float32)
    params = init_mlp_params(kp, in_features, hidden_layer_sizes)

    y_ref = mlp_reference(x, params)

    # --- f32 compute path: tight numerical check ---
    pw32, fin, fout = prepare_mlp_params(params, compute_dtype=jnp.float32)
    fwd_f32 = jax.jit(functools.partial(
        mlp_forward_padded, in_features=fin, out_features=fout,
        compute_dtype=jnp.float32))
    y_f32 = jax.block_until_ready(fwd_f32(x, pw32))
    assert y_f32.shape == (batch, hidden_layer_sizes[-1])
    assert jnp.allclose(y_f32, y_ref, atol=2e-5, rtol=2e-5)

    # --- bf16 MXU path (default): f32 accumulation, looser tolerance ---
    pw16, fin, fout = prepare_mlp_params(params, compute_dtype=jnp.bfloat16)
    fwd_bf16 = jax.jit(functools.partial(
        mlp_forward_padded, in_features=fin, out_features=fout,
        compute_dtype=jnp.bfloat16))
    y_bf16 = jax.block_until_ready(fwd_bf16(x, pw16))
    assert y_bf16.shape == (batch, hidden_layer_sizes[-1])
    assert jnp.allclose(y_bf16, y_ref, atol=5e-2, rtol=5e-2)

    # Convenience (unprepared) path still works.
    y_conv = jax.block_until_ready(mlp_forward(x, params))
    assert jnp.allclose(y_conv, y_ref, atol=5e-2, rtol=5e-2)

    print("KERNEL_OK")
</pallas_src>

<mosaic_0001>
module attributes {stable_mosaic.version = 11 : i64} {
  func.func @kernel(%arg0: i32, %arg1: memref<8x128xf32, #tpu.memory_space<vmem>>, %arg2: memref<128x128xf32, #tpu.memory_space<vmem>>, %arg3: memref<128x128xf32, #tpu.memory_space<vmem>>, %arg4: memref<128x128xf32, #tpu.memory_space<vmem>>, %arg5: memref<8x128xf32, #tpu.memory_space<vmem>>) attributes {dimension_semantics = [#tpu.dimension_semantics<parallel>], iteration_bounds = array<i64: 1>, scalar_prefetch = 0 : i64, scratch_operands = 0 : i64, tpu.core_type = #tpu.core_type<tc>, window_params = [{transform_indices = @transform_0, window_bounds = array<i64: 8, 128>}, {pipeline_mode = #tpu.pipeline_mode<synchronous>, transform_indices = @transform_1, window_bounds = array<i64: 128, 128>}, {pipeline_mode = #tpu.pipeline_mode<synchronous>, transform_indices = @transform_2, window_bounds = array<i64: 128, 128>}, {pipeline_mode = #tpu.pipeline_mode<synchronous>, transform_indices = @transform_3, window_bounds = array<i64: 128, 128>}, {transform_indices = @transform_4, window_bounds = array<i64: 8, 128>}]} {
    %c0 = arith.constant 0 : index
    %c0_0 = arith.constant 0 : index
    %0 = vector.load %arg1[%c0, %c0_0] : memref<8x128xf32, #tpu.memory_space<vmem>>, vector<8x128xf32>
    %c0_1 = arith.constant 0 : index
    %c0_2 = arith.constant 0 : index
    %1 = vector.load %arg2[%c0_1, %c0_2] : memref<128x128xf32, #tpu.memory_space<vmem>>, vector<128x128xf32>
    %cst = arith.constant dense<0.000000e+00> : vector<8x128xf32>
    %2 = tpu.matmul %0, %1, %cst {dimension_numbers = #tpu.dot_dimension_numbers<[1], [0], [0], [1], [0, 0, 1, 1], [], []>} : vector<8x128xf32>, vector<128x128xf32>, vector<8x128xf32> -> vector<8x128xf32>
    %cst_3 = arith.constant 0.000000e+00 : f32
    %3 = vector.broadcast %cst_3 : f32 to vector<8x128xf32>
    %4 = arith.maximumf %2, %3 : vector<8x128xf32>
    %c0_4 = arith.constant 0 : index
    %c0_5 = arith.constant 0 : index
    %5 = vector.load %arg3[%c0_4, %c0_5] : memref<128x128xf32, #tpu.memory_space<vmem>>, vector<128x128xf32>
    %cst_6 = arith.constant dense<0.000000e+00> : vector<8x128xf32>
    %6 = tpu.matmul %4, %5, %cst_6 {dimension_numbers = #tpu.dot_dimension_numbers<[1], [0], [0], [1], [0, 0, 1, 1], [], []>} : vector<8x128xf32>, vector<128x128xf32>, vector<8x128xf32> -> vector<8x128xf32>
    %cst_7 = arith.constant 0.000000e+00 : f32
    %7 = vector.broadcast %cst_7 : f32 to vector<8x128xf32>
    %8 = arith.maximumf %6, %7 : vector<8x128xf32>
    %c0_8 = arith.constant 0 : index
    %c0_9 = arith.constant 0 : index
    %9 = vector.load %arg4[%c0_8, %c0_9] : memref<128x128xf32, #tpu.memory_space<vmem>>, vector<128x128xf32>
    %cst_10 = arith.constant dense<0.000000e+00> : vector<8x128xf32>
    %10 = tpu.matmul %8, %9, %cst_10 {dimension_numbers = #tpu.dot_dimension_numbers<[1], [0], [0], [1], [0, 0, 1, 1], [], []>} : vector<8x128xf32>, vector<128x128xf32>, vector<8x128xf32> -> vector<8x128xf32>
    %cst_11 = arith.constant 0.000000e+00 : f32
    %11 = vector.broadcast %cst_11 : f32 to vector<8x128xf32>
    %12 = arith.maximumf %10, %11 : vector<8x128xf32>
    %c0_12 = arith.constant 0 : index
    %c0_13 = arith.constant 0 : index
    %13 = vector.load %arg5[%c0_12, %c0_13] : memref<8x128xf32, #tpu.memory_space<vmem>>, vector<8x128xf32>
    tpu.vector_store %arg5[%c0_12, %c0_13], %12 {strides = array<i32>} : memref<8x128xf32, #tpu.memory_space<vmem>>, vector<8x128xf32>,
    return
  }
  func.func @transform_0(%arg0: i32) -> (i32, i32) {
    %c0_i32 = arith.constant 0 : i32
    %c0_i32_0 = arith.constant 0 : i32
    return %arg0, %c0_i32 : i32, i32
  }
  func.func @transform_1(%arg0: i32) -> (i32, i32) {
    %c0_i32 = arith.constant 0 : i32
    %c0_i32_0 = arith.constant 0 : i32
    %c0_i32_1 = arith.constant 0 : i32
    return %c0_i32, %c0_i32_0 : i32, i32
  }
  func.func @transform_2(%arg0: i32) -> (i32, i32) {
    %c0_i32 = arith.constant 0 : i32
    %c0_i32_0 = arith.constant 0 : i32
    %c0_i32_1 = arith.constant 0 : i32
    return %c0_i32, %c0_i32_0 : i32, i32
  }
  func.func @transform_3(%arg0: i32) -> (i32, i32) {
    %c0_i32 = arith.constant 0 : i32
    %c0_i32_0 = arith.constant 0 : i32
    %c0_i32_1 = arith.constant 0 : i32
    return %c0_i32, %c0_i32_0 : i32, i32
  }
  func.func @transform_4(%arg0: i32) -> (i32, i32) {
    %c0_i32 = arith.constant 0 : i32
    %c0_i32_0 = arith.constant 0 : i32
    return %arg0, %c0_i32 : i32, i32
  }
}

</mosaic_0001>

<llo_original>
// kernel: mlp_forward_padded.1
$region0: #{mlp_forward_padded.1}
  #allocation0 [shape = 'u32[]', space=smem, size = 0x4, offset = 0x4, fixed_abs, tag = 'smem constant byte address 0x4 - core index']
  #allocation1 [shape = 'u32[144,128]{1,0:T(1,128)}', space=vmem, size = 0x12000, scoped, tag = 'internal scratch']
  %s0 = inlined_call_operand.vmem [shape: f32[8,128], index: 0, kind: input, shape index: {}]
  %s1 = inlined_call_operand.hbm [shape: f32[128,128], index: 1, kind: input, shape index: {}]
  %s2 = inlined_call_operand.hbm [shape: f32[128,128], index: 2, kind: input, shape index: {}]
  %s3 = inlined_call_operand.hbm [shape: f32[128,128], index: 3, kind: input, shape index: {}]
  %s4 = inlined_call_operand.hbm [shape: f32[8,128], index: 4, kind: output, shape index: {}]
  %s5 = sld [smem:[#allocation0]]
  $region38: #{mlp_forward_padded.1} parent=0
    _
  %s7 = ssub.s32 1, %s5
  %s8 = scalar_select 0, %s7, %s5
  $region1: #{mlp_forward_padded.1} parent=0
    #allocation2 [shape = 'u8[65536]{0}', space=vmem, size = 0x10000, scoped, tag = 'input window, operand 1, single buffered']
    #allocation3 [shape = 's32[1]{0}', space=sflag, size = 0x4, scoped, tag = 'scoped memory for mlp_forward_padded.1']
    #allocation4 [shape = 's32[1]{0}', space=sflag, size = 0x4, scoped, tag = 'scoped memory for mlp_forward_padded.1']
    #allocation5 [shape = 'u8[65536]{0}', space=vmem, size = 0x10000, scoped, tag = 'input window, operand 2, single buffered']
    #allocation6 [shape = 's32[1]{0}', space=sflag, size = 0x4, scoped, tag = 'scoped memory for mlp_forward_padded.1']
    #allocation7 [shape = 'u8[65536]{0}', space=vmem, size = 0x10000, scoped, tag = 'input window, operand 3, single buffered']
    #allocation8 [shape = 'u8[4096]{0}', space=vmem, size = 0x1000, scoped, tag = 'output window, operand 0, single buffered']
    %9 = vsyncpa [#allocation3], 0
    %10 = vsyncpa [#allocation6], 0
    %11 = vsyncpa [#allocation4], 0
    // Predicated region
    $region2: #{mlp_forward_padded.1} parent=1 // pred_check
      _
    $region3: #{mlp_forward_padded.1} parent=1 // pred_check_branch
      %13 = sbr.rel (0) target = $region5
    $region4: #{mlp_forward_padded.1} parent=1 // pred_region
      _
    $region5: #{mlp_forward_padded.1} parent=1 // pred_fallthru
      _
    // Predicated region
    $region6: #{mlp_forward_padded.1} parent=1 // pred_check
      _
    $region7: #{mlp_forward_padded.1} parent=1 // pred_check_branch
      %15 = sbr.rel (0) target = $region9
    $region8: #{mlp_forward_padded.1} parent=1 // pred_region
      %s17 = ssub.s32 2048, 2048
      %18 = vsyncadd [#allocation3], %s17
      %s19 = sshll.u32 [#allocation2], 4
      %s20 = int_to_ptr.vmem [resolvable:$true] %s19
      %25 = dma.hbm_to_vmem [thread:$0]  %s1, 2048, %s20, [#allocation3], 128, 128, 8
    $region9: #{mlp_forward_padded.1} parent=1 // pred_fallthru
      _
    // Predicated region
    $region10: #{mlp_forward_padded.1} parent=1 // pred_check
      _
    $region11: #{mlp_forward_padded.1} parent=1 // pred_check_branch
      %27 = sbr.rel (0) target = $region13
    $region12: #{mlp_forward_padded.1} parent=1 // pred_region
      %s29 = ssub.s32 2048, 2048
      %30 = vsyncadd [#allocation6], %s29
      %s31 = sshll.u32 [#allocation5], 4
      %s32 = int_to_ptr.vmem [resolvable:$true] %s31
      %37 = dma.hbm_to_vmem [thread:$0]  %s2, 2048, %s32, [#allocation6], 128, 128, 8
    $region13: #{mlp_forward_padded.1} parent=1 // pred_fallthru
      _
    // Predicated region
    $region14: #{mlp_forward_padded.1} parent=1 // pred_check
      _
    $region15: #{mlp_forward_padded.1} parent=1 // pred_check_branch
      %39 = sbr.rel (0) target = $region17
    $region16: #{mlp_forward_padded.1} parent=1 // pred_region
      %s41 = ssub.s32 2048, 2048
      %42 = vsyncadd [#allocation6], %s41
      %s43 = sshll.u32 [#allocation7], 4
      %s44 = int_to_ptr.vmem [resolvable:$true] %s43
      %49 = dma.hbm_to_vmem [thread:$0]  %s3, 2048, %s44, [#allocation6], 128, 128, 8
    $region17: #{mlp_forward_padded.1} parent=1 // pred_fallthru
      _
    // Predicated region
    $region18: #{mlp_forward_padded.1} parent=1 // pred_check
      _
    $region19: #{mlp_forward_padded.1} parent=1 // pred_check_branch
      %51 = sbr.rel (0) target = $region21
    $region20: #{mlp_forward_padded.1} parent=1 // pred_region
      %52 = dma.done [#allocation3], 2048
    $region21: #{mlp_forward_padded.1} parent=1 // pred_fallthru
      _
    // Predicated region
    $region22: #{mlp_forward_padded.1} parent=1 // pred_check
      _
    $region23: #{mlp_forward_padded.1} parent=1 // pred_check_branch
      %54 = sbr.rel (0) target = $region25
    $region24: #{mlp_forward_padded.1} parent=1 // pred_region
      %55 = dma.done [#allocation6], 2048
    $region25: #{mlp_forward_padded.1} parent=1 // pred_fallthru
      _
    // Predicated region
    $region26: #{mlp_forward_padded.1} parent=1 // pred_check
      _
    $region27: #{mlp_forward_padded.1} parent=1 // pred_check_branch
      %57 = sbr.rel (0) target = $region29
    $region28: #{mlp_forward_padded.1} parent=1 // pred_region
      %58 = dma.done [#allocation6], 2048
    $region29: #{mlp_forward_padded.1} parent=1 // pred_fallthru
      _
    %v59 = vld [vmem:[%s0] sm:$0xff]
    %v60 = vld [vmem:[#allocation2] sm:$0xff]
    %v61 = vld [vmem:[#allocation2 + $0x8] sm:$0xff]
    %v62 = vld [vmem:[#allocation2 + $0x10] sm:$0xff]
    %v63 = vld [vmem:[#allocation2 + $0x18] sm:$0xff]
    %v64 = vld [vmem:[#allocation2 + $0x20] sm:$0xff]
    %v65 = vld [vmem:[#allocation2 + $0x28] sm:$0xff]
    %v66 = vld [vmem:[#allocation2 + $0x30] sm:$0xff]
    %v67 = vld [vmem:[#allocation2 + $0x38] sm:$0xff]
    %v68 = vld [vmem:[#allocation2 + $0x40] sm:$0xff]
    %v69 = vld [vmem:[#allocation2 + $0x48] sm:$0xff]
    %v70 = vld [vmem:[#allocation2 + $0x50] sm:$0xff]
    %v71 = vld [vmem:[#allocation2 + $0x58] sm:$0xff]
    %v72 = vld [vmem:[#allocation2 + $0x60] sm:$0xff]
    %v73 = vld [vmem:[#allocation2 + $0x68] sm:$0xff]
    %v74 = vld [vmem:[#allocation2 + $0x70] sm:$0xff]
    %v75 = vld [vmem:[#allocation2 + $0x78] sm:$0xff]
    %76 = vmatprep.subr.mxu0 0.0
    %77 = vmatpush1.msra.mxu0 %v75
    %78 = vmatprep.subr.mxu0 0.0
    %79 = vmatpush1.msra.mxu0 %v74
    %80 = vmatprep.subr.mxu0 0.0
    %81 = vmatpush1.msra.mxu0 %v73
    %82 = vmatprep.subr.mxu0 0.0
    %83 = vmatpush1.msra.mxu0 %v72
    %84 = vmatprep.subr.mxu0 0.0
    %85 = vmatpush1.msra.mxu0 %v71
    %86 = vmatprep.subr.mxu0 0.0
    %87 = vmatpush1.msra.mxu0 %v70
    %88 = vmatprep.subr.mxu0 0.0
    %89 = vmatpush1.msra.mxu0 %v69
    %90 = vmatprep.subr.mxu0 0.0
    %91 = vmatpush1.msra.mxu0 %v68
    %92 = vmatprep.subr.mxu0 0.0
    %93 = vmatpush1.msra.mxu0 %v67
    %94 = vmatprep.subr.mxu0 0.0
    %95 = vmatpush1.msra.mxu0 %v66
    %96 = vmatprep.subr.mxu0 0.0
    %97 = vmatpush1.msra.mxu0 %v65
    %98 = vmatprep.subr.mxu0 0.0
    %99 = vmatpush1.msra.mxu0 %v64
    %100 = vmatprep.subr.mxu0 0.0
    %101 = vmatpush1.msra.mxu0 %v63
    %102 = vmatprep.subr.mxu0 0.0
    %103 = vmatpush1.msra.mxu0 %v62
    %104 = vmatprep.subr.mxu0 0.0
    %105 = vmatpush1.msra.mxu0 %v61
    %106 = vmatprep.subr.mxu0 0.0
    %107 = vmatpush1.msra.mxu0 %v60
    %108 = vmatprep.subr.mxu0 0.0
    %109 = vmatpush2.msra.mxu0 0.0
    %110 = vmatprep.subr.mxu0 0.0
    %111 = vmatpush2.msra.mxu0 0.0
    %112 = vmatprep.subr.mxu0 0.0
    %113 = vmatpush2.msra.mxu0 0.0
    %114 = vmatprep.subr.mxu0 0.0
    %115 = vmatpush2.msra.mxu0 0.0
    %116 = vmatprep.subr.mxu0 0.0
    %117 = vmatpush2.msra.mxu0 0.0
    %118 = vmatprep.subr.mxu0 0.0
    %119 = vmatpush2.msra.mxu0 0.0
    %120 = vmatprep.subr.mxu0 0.0
    %121 = vmatpush2.msra.mxu0 0.0
    %122 = vmatprep.subr.mxu0 0.0
    %123 = vmatpush2.msra.mxu0 0.0
    %124 = vmatprep.subr.mxu0 0.0
    %125 = vmatpush2.msra.mxu0 0.0
    %126 = vmatprep.subr.mxu0 0.0
    %127 = vmatpush2.msra.mxu0 0.0
    %128 = vmatprep.subr.mxu0 0.0
    %129 = vmatpush2.msra.mxu0 0.0
    %130 = vmatprep.subr.mxu0 0.0
    %131 = vmatpush2.msra.mxu0 0.0
    %132 = vmatprep.subr.mxu0 0.0
    %133 = vmatpush2.msra.mxu0 0.0
    %134 = vmatprep.subr.mxu0 0.0
    %135 = vmatpush2.msra.mxu0 0.0
    %136 = vmatprep.subr.mxu0 0.0
    %137 = vmatpush2.msra.mxu0 0.0
    %138 = vmatprep.subr.mxu0 0.0
    %139 = vmatpush2.msra.mxu0 0.0
    %140 = vmatprep.mubr.f32.mxu0 0.0
    %141 = vmatmul.mubr.f32.gmra.mxu0 %v59
    %v142 = vpop.f32.mrf.mxu0
    %v143 = vadd.f32 0.0, %v142
    %v144 = vpop.f32.mrf.mxu0
    %145 = vdwg.mxu0
    %v146 = vmax.f32 %v143, 0.0
    %v147 = vld [vmem:[#allocation5] sm:$0xff]
    %v148 = vld [vmem:[#allocation5 + $0x8] sm:$0xff]
    %v149 = vld [vmem:[#allocation5 + $0x10] sm:$0xff]
    %v150 = vld [vmem:[#allocation5 + $0x18] sm:$0xff]
    %v151 = vld [vmem:[#allocation5 + $0x20] sm:$0xff]
    %v152 = vld [vmem:[#allocation5 + $0x28] sm:$0xff]
    %v153 = vld [vmem:[#allocation5 + $0x30] sm:$0xff]
    %v154 = vld [vmem:[#allocation5 + $0x38] sm:$0xff]
    %v155 = vld [vmem:[#allocation5 + $0x40] sm:$0xff]
    %v156 = vld [vmem:[#allocation5 + $0x48] sm:$0xff]
    %v157 = vld [vmem:[#allocation5 + $0x50] sm:$0xff]
    %v158 = vld [vmem:[#allocation5 + $0x58] sm:$0xff]
    %v159 = vld [vmem:[#allocation5 + $0x60] sm:$0xff]
    %v160 = vld [vmem:[#allocation5 + $0x68] sm:$0xff]
    %v161 = vld [vmem:[#allocation5 + $0x70] sm:$0xff]
    %v162 = vld [vmem:[#allocation5 + $0x78] sm:$0xff]
    %163 = vmatprep.subr.mxu0 0.0
    %164 = vmatpush1.msra.mxu0 %v162
    %165 = vmatprep.subr.mxu0 0.0
    %166 = vmatpush1.msra.mxu0 %v161
    %167 = vmatprep.subr.mxu0 0.0
    %168 = vmatpush1.msra.mxu0 %v160
    %169 = vmatprep.subr.mxu0 0.0
    %170 = vmatpush1.msra.mxu0 %v159
    %171 = vmatprep.subr.mxu0 0.0
    %172 = vmatpush1.msra.mxu0 %v158
    %173 = vmatprep.subr.mxu0 0.0
    %174 = vmatpush1.msra.mxu0 %v157
    %175 = vmatprep.subr.mxu0 0.0
    %176 = vmatpush1.msra.mxu0 %v156
    %177 = vmatprep.subr.mxu0 0.0
    %178 = vmatpush1.msra.mxu0 %v155
    %179 = vmatprep.subr.mxu0 0.0
    %180 = vmatpush1.msra.mxu0 %v154
    %181 = vmatprep.subr.mxu0 0.0
    %182 = vmatpush1.msra.mxu0 %v153
    %183 = vmatprep.subr.mxu0 0.0
    %184 = vmatpush1.msra.mxu0 %v152
    %185 = vmatprep.subr.mxu0 0.0
    %186 = vmatpush1.msra.mxu0 %v151
    %187 = vmatprep.subr.mxu0 0.0
    %188 = vmatpush1.msra.mxu0 %v150
    %189 = vmatprep.subr.mxu0 0.0
    %190 = vmatpush1.msra.mxu0 %v149
    %191 = vmatprep.subr.mxu0 0.0
    %192 = vmatpush1.msra.mxu0 %v148
    %193 = vmatprep.subr.mxu0 0.0
    %194 = vmatpush1.msra.mxu0 %v147
    %195 = vmatprep.subr.mxu0 0.0
    %196 = vmatpush2.msra.mxu0 0.0
    %197 = vmatprep.subr.mxu0 0.0
    %198 = vmatpush2.msra.mxu0 0.0
    %199 = vmatprep.subr.mxu0 0.0
    %200 = vmatpush2.msra.mxu0 0.0
    %201 = vmatprep.subr.mxu0 0.0
    %202 = vmatpush2.msra.mxu0 0.0
    %203 = vmatprep.subr.mxu0 0.0
    %204 = vmatpush2.msra.mxu0 0.0
    %205 = vmatprep.subr.mxu0 0.0
    %206 = vmatpush2.msra.mxu0 0.0
    %207 = vmatprep.subr.mxu0 0.0
    %208 = vmatpush2.msra.mxu0 0.0
    %209 = vmatprep.subr.mxu0 0.0
    %210 = vmatpush2.msra.mxu0 0.0
    %211 = vmatprep.subr.mxu0 0.0
    %212 = vmatpush2.msra.mxu0 0.0
    %213 = vmatprep.subr.mxu0 0.0
    %214 = vmatpush2.msra.mxu0 0.0
    %215 = vmatprep.subr.mxu0 0.0
    %216 = vmatpush2.msra.mxu0 0.0
    %217 = vmatprep.subr.mxu0 0.0
    %218 = vmatpush2.msra.mxu0 0.0
    %219 = vmatprep.subr.mxu0 0.0
    %220 = vmatpush2.msra.mxu0 0.0
    %221 = vmatprep.subr.mxu0 0.0
    %222 = vmatpush2.msra.mxu0 0.0
    %223 = vmatprep.subr.mxu0 0.0
    %224 = vmatpush2.msra.mxu0 0.0
    %225 = vmatprep.subr.mxu0 0.0
    %226 = vmatpush2.msra.mxu0 0.0
    %227 = vmatprep.mubr.f32.mxu0 0.0
    %228 = vmatmul.mubr.f32.gmra.mxu0 %v146
    %v229 = vpop.f32.mrf.mxu0
    %v230 = vadd.f32 0.0, %v229
    %v231 = vpop.f32.mrf.mxu0
    %232 = vdwg.mxu0
    %v233 = vmax.f32 %v230, 0.0
    %v234 = vld [vmem:[#allocation7] sm:$0xff]
    %v235 = vld [vmem:[#allocation7 + $0x8] sm:$0xff]
    %v236 = vld [vmem:[#allocation7 + $0x10] sm:$0xff]
    %v237 = vld [vmem:[#allocation7 + $0x18] sm:$0xff]
    %v238 = vld [vmem:[#allocation7 + $0x20] sm:$0xff]
    %v239 = vld [vmem:[#allocation7 + $0x28] sm:$0xff]
    %v240 = vld [vmem:[#allocation7 + $0x30] sm:$0xff]
    %v241 = vld [vmem:[#allocation7 + $0x38] sm:$0xff]
    %v242 = vld [vmem:[#allocation7 + $0x40] sm:$0xff]
    %v243 = vld [vmem:[#allocation7 + $0x48] sm:$0xff]
    %v244 = vld [vmem:[#allocation7 + $0x50] sm:$0xff]
    %v245 = vld [vmem:[#allocation7 + $0x58] sm:$0xff]
    %v246 = vld [vmem:[#allocation7 + $0x60] sm:$0xff]
    %v247 = vld [vmem:[#allocation7 + $0x68] sm:$0xff]
    %v248 = vld [vmem:[#allocation7 + $0x70] sm:$0xff]
    %v249 = vld [vmem:[#allocation7 + $0x78] sm:$0xff]
    %250 = vmatprep.subr.mxu0 0.0
    %251 = vmatpush1.msra.mxu0 %v249
    %252 = vmatprep.subr.mxu0 0.0
    %253 = vmatpush1.msra.mxu0 %v248
    %254 = vmatprep.subr.mxu0 0.0
    %255 = vmatpush1.msra.mxu0 %v247
    %256 = vmatprep.subr.mxu0 0.0
    %257 = vmatpush1.msra.mxu0 %v246
    %258 = vmatprep.subr.mxu0 0.0
    %259 = vmatpush1.msra.mxu0 %v245
    %260 = vmatprep.subr.mxu0 0.0
    %261 = vmatpush1.msra.mxu0 %v244
    %262 = vmatprep.subr.mxu0 0.0
    %263 = vmatpush1.msra.mxu0 %v243
    %264 = vmatprep.subr.mxu0 0.0
    %265 = vmatpush1.msra.mxu0 %v242
    %266 = vmatprep.subr.mxu0 0.0
    %267 = vmatpush1.msra.mxu0 %v241
    %268 = vmatprep.subr.mxu0 0.0
    %269 = vmatpush1.msra.mxu0 %v240
    %270 = vmatprep.subr.mxu0 0.0
    %271 = vmatpush1.msra.mxu0 %v239
    %272 = vmatprep.subr.mxu0 0.0
    %273 = vmatpush1.msra.mxu0 %v238
    %274 = vmatprep.subr.mxu0 0.0
    %275 = vmatpush1.msra.mxu0 %v237
    %276 = vmatprep.subr.mxu0 0.0
    %277 = vmatpush1.msra.mxu0 %v236
    %278 = vmatprep.subr.mxu0 0.0
    %279 = vmatpush1.msra.mxu0 %v235
    %280 = vmatprep.subr.mxu0 0.0
    %281 = vmatpush1.msra.mxu0 %v234
    %282 = vmatprep.subr.mxu0 0.0
    %283 = vmatpush2.msra.mxu0 0.0
    %284 = vmatprep.subr.mxu0 0.0
    %285 = vmatpush2.msra.mxu0 0.0
    %286 = vmatprep.subr.mxu0 0.0
    %287 = vmatpush2.msra.mxu0 0.0
    %288 = vmatprep.subr.mxu0 0.0
    %289 = vmatpush2.msra.mxu0 0.0
    %290 = vmatprep.subr.mxu0 0.0
    %291 = vmatpush2.msra.mxu0 0.0
    %292 = vmatprep.subr.mxu0 0.0
    %293 = vmatpush2.msra.mxu0 0.0
    %294 = vmatprep.subr.mxu0 0.0
    %295 = vmatpush2.msra.mxu0 0.0
    %296 = vmatprep.subr.mxu0 0.0
    %297 = vmatpush2.msra.mxu0 0.0
    %298 = vmatprep.subr.mxu0 0.0
    %299 = vmatpush2.msra.mxu0 0.0
    %300 = vmatprep.subr.mxu0 0.0
    %301 = vmatpush2.msra.mxu0 0.0
    %302 = vmatprep.subr.mxu0 0.0
    %303 = vmatpush2.msra.mxu0 0.0
    %304 = vmatprep.subr.mxu0 0.0
    %305 = vmatpush2.msra.mxu0 0.0
    %306 = vmatprep.subr.mxu0 0.0
    %307 = vmatpush2.msra.mxu0 0.0
    %308 = vmatprep.subr.mxu0 0.0
    %309 = vmatpush2.msra.mxu0 0.0
    %310 = vmatprep.subr.mxu0 0.0
    %311 = vmatpush2.msra.mxu0 0.0
    %312 = vmatprep.subr.mxu0 0.0
    %313 = vmatpush2.msra.mxu0 0.0
    %314 = vmatprep.mubr.f32.mxu0 0.0
    %315 = vmatmul.mubr.f32.gmra.mxu0 %v233
    %v316 = vpop.f32.mrf.mxu0
    %v317 = vadd.f32 0.0, %v316
    %v318 = vpop.f32.mrf.mxu0
    %319 = vdwg.mxu0
    %v320 = vmax.f32 %v317, 0.0
    %321 = vst [vmem:[#allocation8] sm:$0xff] %v320
    // Predicated region
    $region30: #{mlp_forward_padded.1} parent=1 // pred_check
      _
    $region31: #{mlp_forward_padded.1} parent=1 // pred_check_branch
      %323 = sbr.rel (0) target = $region33
    $region32: #{mlp_forward_padded.1} parent=1 // pred_region
      %s325 = ssub.s32 128, 128
      %326 = vsyncadd [#allocation4], %s325
      %s328 = sshll.u32 [#allocation8], 4
      %s329 = int_to_ptr.vmem [resolvable:$true] %s328
      %331 = dma.vmem_to_hbm [thread:$0]  %s329, 128, %s4, [#allocation4]
    $region33: #{mlp_forward_padded.1} parent=1 // pred_fallthru
      _
    // Predicated region
    $region34: #{mlp_forward_padded.1} parent=1 // pred_check
      _
    $region35: #{mlp_forward_padded.1} parent=1 // pred_check_branch
      %333 = sbr.rel (0) target = $region37
    $region36: #{mlp_forward_padded.1} parent=1 // pred_region
      %334 = dma.done [#allocation4], 128
    $region37: #{mlp_forward_padded.1} parent=1 // pred_fallthru
      _
    %335 = vsyncpa [#allocation3], 1
    %336 = vsyncpa [#allocation6], 1
    %337 = vsyncpa [#allocation4], 1

</llo_original>
